<compile_context>
chip_gen: v6e
topology: v6e:2x2x1
jax: 0.10.0
libtpu: 0.0.40
codegen_flags: <defaults>
</compile_context>

<pallas_src>
import jax
import jax.numpy as jnp
from jax.experimental import pallas as pl
from jax.experimental.pallas import tpu as pltpu


# --------------------------------------------------------------------------
# Phase 1: per-channel spatial sums.  x block is (C, THW1): channels on
# sublanes, spatial on lanes.  The (C,1) output block is revisited across the
# innermost "arbitrary" axis, acting as the accumulator.
# --------------------------------------------------------------------------
def _pool_kernel(x_ref, sum_ref):
    @pl.when(pl.program_id(2) == 0)
    def _():
        sum_ref[...] = jnp.zeros_like(sum_ref)

    x = x_ref[...].astype(jnp.float32)                      # (C, THW1)
    sum_ref[...] += jnp.sum(x, axis=1, keepdims=True)       # lane reduce -> (C, 1)


# --------------------------------------------------------------------------
# Phase 2: apply gates to one (C, THW2) block.  sSE is a lane-dense
# (1, C) @ (C, THW) matmul; the combine is fused as x * (cse + sse) with x
# kept in its native dtype.
# --------------------------------------------------------------------------
def _apply_kernel(x_ref, cse_ref, ws_ref, bs_ref, o_ref):
    x = x_ref[...]                                          # (C, THW) native dtype
    sse = jax.nn.sigmoid(
        jnp.dot(ws_ref[...].astype(x.dtype), x,
                preferred_element_type=jnp.float32)
        + bs_ref[...])                                      # (1, THW) f32 per-pixel gate
    gate = (cse_ref[...] + sse).astype(x.dtype)             # (C, THW)
    o_ref[...] = x * gate


# --------------------------------------------------------------------------
# Tiling helpers
# --------------------------------------------------------------------------
def _vmem_capacity_bytes():
    """Physical VMEM of the local TPU (64 MiB on v7x, 128 MiB on v5e/v6e)."""
    try:
        info = pltpu.get_tpu_info()
        cap = getattr(info, "vmem_capacity_bytes", None)
        if cap:
            return int(cap)
    except Exception:
        pass
    return 64 * 2**20   # conservative (v7x-sized) default


def _choose_hw_tiling(hw, target):
    """Pick a lane-dense (multiple-of-128) spatial tile and a padded HW.

    Returns (thw, hw_padded) with thw % 128 == 0, thw <= max(128, target) and
    thw | hw_padded.  Zero-padding is introduced only when hw has no suitable
    multiple-of-128 divisor, so the common aligned case costs no extra copy.
    """
    tgt = max(128, (int(target) // 128) * 128)
    if hw % 128 == 0:
        t = min(hw, tgt)
        t -= t % 128
        while t >= 128:
            if hw % t == 0:
                # Accept only if reasonably close to the target; otherwise a
                # poorly-factorable hw (e.g. 128 * prime) would force tiny
                # tiles -- prefer a little padding instead.
                if 4 * t >= min(hw, tgt) or t == hw:
                    return t, hw
                break
            t -= 128
    thw = min(tgt, ((hw + 127) // 128) * 128)
    hw_padded = ((hw + thw - 1) // thw) * thw
    return thw, hw_padded


# --------------------------------------------------------------------------
# Forward pass
# --------------------------------------------------------------------------
def scse_forward(x_nchw, params, *, hw_tile_target=None, phase1_tile_target=None):
    """x_nchw: (N, C, H, W).  params: kernel-layout weights (see init_params)."""
    N, C, H, W = x_nchw.shape
    HW = H * W
    itemsize = jnp.dtype(x_nchw.dtype).itemsize

    # ---- generation-aware VMEM budgeting ----
    vmem_cap = _vmem_capacity_bytes()
    small_vmem = vmem_cap < 96 * 2**20                 # v7x (64 MiB) vs v5e/v6e (128 MiB)
    vmem_ceiling = min(vmem_cap * 3 // 4, 100 * 2**20)  # 48 MiB on v7x, 96 MiB on v5e/v6e

    if hw_tile_target is None:
        p2_bytes = (3 if small_vmem else 4) * 2**20    # phase 2: 2-in + 2-out buffers
        hw_tile_target = max(512, p2_bytes // (itemsize * C))
    if phase1_tile_target is None:
        p1_bytes = (6 if small_vmem else 8) * 2**20    # phase 1: input-only stream
        phase1_tile_target = max(int(hw_tile_target), p1_bytes // (itemsize * C))

    # ---- spatial tiling (+ optional zero padding to a multiple of the tile) ----
    thw2, hwp = _choose_hw_tiling(HW, hw_tile_target)
    n_t2 = hwp // thw2

    # Phase-1 tile: a multiple of the phase-2 tile that divides the padded HW
    # and stays under the larger phase-1 byte target.
    max_f = max(1, int(phase1_tile_target) // thw2)
    f = 1
    for cand in range(min(max_f, n_t2), 0, -1):
        if n_t2 % cand == 0:
            f = cand
            break
    thw1 = thw2 * f
    n_t1 = hwp // thw1

    # Split the phase-1 HW reduction into 2 parallel chunks so both v7x
    # TensorCores stream x even for batch=1 (harmless on v5e/v6e).
    n_chunks = 2 if (n_t1 >= 2 and n_t1 % 2 == 0) else 1
    n_t1c = n_t1 // n_chunks

    # Free reshape; pad spatial with zeros only when required (zeros do not
    # perturb the pooled sum, and padded output columns are sliced off).
    x = x_nchw.reshape(N, C, HW)
    if hwp != HW:
        x = jnp.pad(x, ((0, 0), (0, 0), (0, hwp - HW)))

    block1_bytes = C * thw1 * itemsize
    block2_bytes = C * thw2 * itemsize
    vmem1 = int(min(vmem_ceiling, max(32 * 2**20, 4 * block1_bytes)))
    vmem2 = int(min(vmem_ceiling, max(32 * 2**20, 6 * block2_bytes)))

    # ---- phase 1: per-channel spatial sums (chunked reduction over HW tiles) ----
    partial = pl.pallas_call(
        _pool_kernel,
        out_shape=jax.ShapeDtypeStruct((N, n_chunks, C, 1), jnp.float32),
        grid_spec=pltpu.PrefetchScalarGridSpec(
            num_scalar_prefetch=0,
            grid=(N, n_chunks, n_t1c),
            in_specs=[
                pl.BlockSpec((None, C, thw1),
                             lambda n, c, t, _ntc=n_t1c: (n, 0, c * _ntc + t)),
            ],
            out_specs=pl.BlockSpec((None, None, C, 1), lambda n, c, t: (n, c, 0, 0)),
        ),
        compiler_params=pltpu.CompilerParams(
            dimension_semantics=("parallel", "parallel", "arbitrary"),
            vmem_limit_bytes=vmem1),
        cost_estimate=pl.CostEstimate(
            flops=int(N * C * hwp),
            transcendentals=0,
            bytes_accessed=int(N * C * hwp * itemsize + N * n_chunks * C * 4)),
    )(x)

    # ---- tiny squeeze/excite MLP in plain JAX on the pooled (N, C) vector ----
    pooled = jnp.sum(partial[:, :, :, 0], axis=1) * (1.0 / HW)              # (N, C)
    h = jnp.maximum(pooled @ params["w1"].T + params["b1"][:, 0], 0.0)      # (N, Cr)
    cse = jax.nn.sigmoid(h @ params["w2"].T + params["b2"][:, 0])           # (N, C)
    cse = cse[:, :, None].astype(jnp.float32)                               # (N, C, 1)

    # ---- phase 2: apply cSE + sSE gates tile-by-tile (fully parallel grid) ----
    out = pl.pallas_call(
        _apply_kernel,
        out_shape=jax.ShapeDtypeStruct((N, C, hwp), x.dtype),
        grid_spec=pltpu.PrefetchScalarGridSpec(
            num_scalar_prefetch=0,
            grid=(N, n_t2),
            in_specs=[
                pl.BlockSpec((None, C, thw2), lambda n, t: (n, 0, t)),  # x tile
                pl.BlockSpec((None, C, 1), lambda n, t: (n, 0, 0)),     # cSE gate
                pl.BlockSpec((1, C), lambda n, t: (0, 0)),              # ws
                pl.BlockSpec((1, 1), lambda n, t: (0, 0)),              # bs
            ],
            out_specs=pl.BlockSpec((None, C, thw2), lambda n, t: (n, 0, t)),
        ),
        compiler_params=pltpu.CompilerParams(
            dimension_semantics=("parallel", "parallel"),
            vmem_limit_bytes=vmem2),
        cost_estimate=pl.CostEstimate(
            flops=int(N * hwp * (4 * C + 2)),
            transcendentals=int(N * hwp),
            bytes_accessed=int(2 * N * C * hwp * itemsize + N * C * 4)),
    )(x, cse, params["ws"], params["bs"])

    if hwp != HW:
        out = out[:, :, :HW]
    return out.reshape(N, C, H, W)


def init_params(key, in_channels, reduction=16):
    """Deterministic synthetic weights, stored in kernel-friendly layouts:
    w1 (Cr, C), b1 (Cr, 1)  -- cSE conv1 (C -> Cr)
    w2 (C, Cr), b2 (C, 1)   -- cSE conv2 (Cr -> C)
    ws (1, C),  bs (1, 1)   -- sSE conv  (C -> 1)
    """
    cr = max(1, in_channels // reduction)
    k1, k2, k3, k4, k5, k6 = jax.random.split(key, 6)
    return {
        "w1": jax.random.normal(k1, (cr, in_channels), jnp.float32) * 0.1,
        "b1": jax.random.normal(k2, (cr, 1), jnp.float32) * 0.1,
        "w2": jax.random.normal(k3, (in_channels, cr), jnp.float32) * 0.1,
        "b2": jax.random.normal(k4, (in_channels, 1), jnp.float32) * 0.1,
        "ws": jax.random.normal(k5, (1, in_channels), jnp.float32) * 0.1,
        "bs": jax.random.normal(k6, (1, 1), jnp.float32) * 0.1,
    }


def _reference(x_nchw, p):
    """Pure-JAX reference matching the PyTorch forward semantics (NCHW)."""
    pooled = jnp.mean(x_nchw, axis=(2, 3))                                  # (N, C)
    h = jnp.maximum(pooled @ p["w1"].T + p["b1"][:, 0], 0.0)                # (N, Cr)
    cse = jax.nn.sigmoid(h @ p["w2"].T + p["b2"][:, 0])[:, :, None, None]   # (N, C, 1, 1)
    sse_logit = jnp.einsum("nchw,c->nhw", x_nchw, p["ws"][0]) + p["bs"][0, 0]
    sse = jax.nn.sigmoid(sse_logit)[:, None, :, :]                          # (N, 1, H, W)
    return x_nchw * cse + x_nchw * sse


if __name__ == "__main__":
    key = jax.random.PRNGKey(0)
    kx, kx2, kp = jax.random.split(key, 3)

    N, C, H, W = 2, 32, 32, 32          # in_channels=32, reduction=16 -> hidden=2
    x = jax.random.normal(kx, (N, C, H, W), jnp.float32)
    params = init_params(kp, C, reduction=16)

    # Small tile targets so the tiled / accumulating / chunk-split paths are
    # all exercised at this small size: HW=1024 -> phase 2: 8 tiles of 128,
    # phase 1: 2 parallel chunks x 2 tiles of 256.
    out = scse_forward(x, params, hw_tile_target=128, phase1_tile_target=256)
    out = jax.block_until_ready(out)
    ref = _reference(x, params)
    assert out.shape == x.shape
    assert jnp.allclose(out, ref, atol=1e-4, rtol=1e-4), "mismatch vs reference"

    # Non-multiple-of-128 spatial size exercises the zero-padding path.
    H2 = W2 = 15
    x2 = jax.random.normal(kx2, (N, C, H2, W2), jnp.float32)
    out2 = jax.block_until_ready(scse_forward(x2, params, hw_tile_target=128))
    ref2 = _reference(x2, params)
    assert out2.shape == x2.shape
    assert jnp.allclose(out2, ref2, atol=1e-4, rtol=1e-4), "mismatch vs reference (padded)"

    print("KERNEL_OK")
</pallas_src>

<mosaic_0001>
module attributes {stable_mosaic.version = 11 : i64} {
  func.func @_pool_kernel(%arg0: i32, %arg1: i32, %arg2: i32, %arg3: memref<1x32x256xf32, #tpu.memory_space<vmem>>, %arg4: memref<1x1x32x1xf32, #tpu.memory_space<vmem>>) attributes {dimension_semantics = [#tpu.dimension_semantics<parallel>, #tpu.dimension_semantics<parallel>, #tpu.dimension_semantics<arbitrary>], iteration_bounds = array<i64: 2, 2, 2>, scalar_prefetch = 0 : i64, scratch_operands = 0 : i64, tpu.core_type = #tpu.core_type<tc>, window_params = [{transform_indices = @transform_0, window_bounds = array<i64: 1, 32, 256>}, {transform_indices = @transform_1, window_bounds = array<i64: 1, 1, 32, 1>}]} {
    %c0_i32 = arith.constant 0 : i32
    %0 = arith.cmpi eq, %arg2, %c0_i32 : i32
    %1 = arith.extui %0 : i1 to i32
    %c0_i32_0 = arith.constant 0 : i32
    %2 = arith.cmpi ne, %1, %c0_i32_0 : i32
    scf.if %2 {
      %cst_11 = arith.constant 0.000000e+00 : f32
      %13 = vector.broadcast %cst_11 : f32 to vector<32x1xf32>
      %c0_12 = arith.constant 0 : index
      %c0_13 = arith.constant 0 : index
      %c0_14 = arith.constant 0 : index
      %c0_15 = arith.constant 0 : index
      %14 = vector.load %arg4[%c0_12, %c0_13, %c0_14, %c0_15] : memref<1x1x32x1xf32, #tpu.memory_space<vmem>>, vector<1x1x32x1xf32>
      %15 = vector.shape_cast %14 : vector<1x1x32x1xf32> to vector<32x1xf32>
      %16 = vector.shape_cast %13 : vector<32x1xf32> to vector<1x1x32x1xf32>
      tpu.vector_store %arg4[%c0_12, %c0_13, %c0_14, %c0_15], %16 {strides = array<i32>} : memref<1x1x32x1xf32, #tpu.memory_space<vmem>>, vector<1x1x32x1xf32>,
    } else {
    }
    %c0 = arith.constant 0 : index
    %c0_1 = arith.constant 0 : index
    %c0_2 = arith.constant 0 : index
    %3 = vector.load %arg3[%c0, %c0_1, %c0_2] : memref<1x32x256xf32, #tpu.memory_space<vmem>>, vector<1x32x256xf32>
    %4 = vector.shape_cast %3 : vector<1x32x256xf32> to vector<32x256xf32>
    %c0_3 = arith.constant 0 : index
    %c0_4 = arith.constant 0 : index
    %c0_5 = arith.constant 0 : index
    %c0_6 = arith.constant 0 : index
    %5 = vector.load %arg4[%c0_3, %c0_4, %c0_5, %c0_6] : memref<1x1x32x1xf32, #tpu.memory_space<vmem>>, vector<1x1x32x1xf32>
    %6 = vector.shape_cast %5 : vector<1x1x32x1xf32> to vector<32x1xf32>
    %cst = arith.constant dense<0.000000e+00> : vector<32xf32>
    %7 = vector.multi_reduction <add>, %4, %cst [1] : vector<32x256xf32> to vector<32xf32>
    %8 = vector.shape_cast %7 : vector<32xf32> to vector<32x1xf32>
    %9 = arith.addf %6, %8 : vector<32x1xf32>
    %c0_7 = arith.constant 0 : index
    %c0_8 = arith.constant 0 : index
    %c0_9 = arith.constant 0 : index
    %c0_10 = arith.constant 0 : index
    %10 = vector.load %arg4[%c0_7, %c0_8, %c0_9, %c0_10] : memref<1x1x32x1xf32, #tpu.memory_space<vmem>>, vector<1x1x32x1xf32>
    %11 = vector.shape_cast %10 : vector<1x1x32x1xf32> to vector<32x1xf32>
    %12 = vector.shape_cast %9 : vector<32x1xf32> to vector<1x1x32x1xf32>
    tpu.vector_store %arg4[%c0_7, %c0_8, %c0_9, %c0_10], %12 {strides = array<i32>} : memref<1x1x32x1xf32, #tpu.memory_space<vmem>>, vector<1x1x32x1xf32>,
    return
  }
  func.func @transform_0(%arg0: i32, %arg1: i32, %arg2: i32) -> (i32, i32, i32) {
    %c2_i32 = arith.constant 2 : i32
    %0 = arith.muli %arg1, %c2_i32 : i32
    %1 = arith.addi %0, %arg2 : i32
    %c0_i32 = arith.constant 0 : i32
    %c0_i32_0 = arith.constant 0 : i32
    return %arg0, %c0_i32, %1 : i32, i32, i32
  }
  func.func @transform_1(%arg0: i32, %arg1: i32, %arg2: i32) -> (i32, i32, i32, i32) {
    %c0_i32 = arith.constant 0 : i32
    %c0_i32_0 = arith.constant 0 : i32
    %c0_i32_1 = arith.constant 0 : i32
    return %arg0, %arg1, %c0_i32, %c0_i32_0 : i32, i32, i32, i32
  }
}

</mosaic_0001>

<llo_original>
// kernel: tpu_custom_call.1
$region0: #{tpu_custom_call.1}
  #allocation0 [shape = 'u32[]', space=smem, size = 0x4, offset = 0x4, fixed_abs, tag = 'smem constant byte address 0x4 - core index']
  #allocation1 [shape = 'u32[144,128]{1,0:T(1,128)}', space=vmem, size = 0x12000, scoped, tag = 'internal scratch']
  %s0 = inlined_call_operand.hbm [shape: f32[2,32,1024], index: 0, kind: input, shape index: {}]
  %s1 = inlined_call_operand.vmem [shape: f32[2,2,32,1], index: 1, kind: output, shape index: {}]
  %s2 = sld [smem:[#allocation0]]
  $region45: #{tpu_custom_call.1} parent=0
    _
  %s4 = ssub.s32 1, %s2
  %s5 = scalar_select 0, %s4, %s2
  $region1: #{tpu_custom_call.1} parent=0
    #allocation2 [shape = 'u8[65536]{0}', space=vmem, size = 0x10000, scoped, tag = 'input window, operand 0']
    #allocation3 [shape = 's32[2]{0}', space=sflag, size = 0x8, scoped, tag = 'scoped memory for tpu_custom_call.1']
    %6 = vsyncpa [#allocation3], 0
    %s7 = scalar_lea.sflag [#allocation3], 1
    %8 = vsyncpa %s7, 0
    loop: start=0, step=1, limit=10
    $region2: #{tpu_custom_call.1} parent=1 // loop_pre_header
      _
    $region3: #{tpu_custom_call.1} parent=1 // loop_header
      %s10 = sphi 0, %s14
      %p11 = scmp.ge.s32.totalorder %s10, 10
      %s17 = sphi 0, %s36
      %s18 = sphi 0, %s32
      %s19 = sphi 0, %s28
      %s20 = sphi 0, %s17
      %s21 = sphi 0, %s18
      %s22 = sphi 0, %s19
      %s23 = sphi 0, %s20
      %s24 = sphi 0, %s21
      %s25 = sphi 0, %s22
      %s45 = sphi 0, %s47
      %s48 = sphi 0, %s45
      %s49 = sphi 0, %s48
      %s65 = sphi 0, %s49
      %s73 = sphi 0, %s75
      %s76 = sphi 0, %s73
      %s77 = sphi 0, %s76
      %s93 = sphi 0, %s77
    $region4: #{tpu_custom_call.1} parent=1 // loop_header_branch
      %13 = sbr.rel (%p11) target = $region8
    $region5: #{tpu_custom_call.1} parent=1 // loop_body
      %s15 = ssub.s32 %s10, 1
      %s16 = ssub.s32 %s10, 2
      %s26 = sadd.s32 1, %s19
      %p27 = scmp.ge.s32.totalorder %s26, 2
      %s28 = scalar_select %p27, 0, %s26
      %s29 = sadd.s32 1, %s18
      %s30 = scalar_select %p27, %s29, %s18
      %p31 = scmp.ge.s32.totalorder %s30, 2
      %s32 = scalar_select %p31, 0, %s30
      %s33 = sadd.s32 1, %s17
      %s34 = scalar_select %p31, %s33, %s17
      %p35 = scmp.ge.s32.totalorder %s34, 2
      %s36 = scalar_select %p35, 0, %s34
      %s37 = smul.u32 %s18, 2
      %s38 = sadd.s32 %s37, %s19
      %s39 = smul.u32 %s32, 2
      %s40 = sadd.s32 %s39, %s28
      %s41 = ssub.s32 %s17, %s36
      %s42 = ssub.s32 %s38, %s40
      %s43 = sor.u32 %s41, %s42
      %p44 = scmp.eq.s32.totalorder %s43, 0
      %s46 = sadd.s32 %s45, 1
      %s47 = scalar_select %p44, %s45, %s46
      %p50 = pneg %p44
      %p51 = scmp.eq.s32.totalorder %s10, 7
      %p52 = por %p50, %p51
      %p53 = scmp.ne.s32.totalorder %s45, %s48
      %p54 = scmp.eq.s32.totalorder %s10, 0
      %p55 = por %p53, %p54
      %p56 = scmp.ne.s32.totalorder %s45, %s48
      %p57 = scmp.eq.s32.totalorder %s15, 7
      %p58 = por %p56, %p57
      %p59 = scmp.ne.s32.totalorder %s48, %s49
      %p60 = scmp.eq.s32.totalorder %s15, 0
      %p61 = por %p59, %p60
      %p62 = scmp.ne.s32.totalorder %s48, %s49
      %p63 = scmp.eq.s32.totalorder %s16, 7
      %p64 = por %p62, %p63
      %p66 = scmp.ne.s32.totalorder %s49, %s65
      %p67 = scmp.eq.s32.totalorder %s16, 0
      %p68 = por %p66, %p67
      %s69 = ssub.s32 %s17, %s36
      %s70 = ssub.s32 %s18, %s32
      %s71 = sor.u32 %s69, %s70
      %p72 = scmp.eq.s32.totalorder %s71, 0
      %s74 = sadd.s32 %s73, 1
      %s75 = scalar_select %p72, %s73, %s74
      %p78 = pneg %p72
      %p79 = scmp.eq.s32.totalorder %s10, 7
      %p80 = por %p78, %p79
      %p81 = scmp.ne.s32.totalorder %s73, %s76
      %p82 = scmp.eq.s32.totalorder %s10, 0
      %p83 = por %p81, %p82
      %p84 = scmp.ne.s32.totalorder %s73, %s76
      %p85 = scmp.eq.s32.totalorder %s15, 7
      %p86 = por %p84, %p85
      %p87 = scmp.ne.s32.totalorder %s76, %s77
      %p88 = scmp.eq.s32.totalorder %s15, 0
      %p89 = por %p87, %p88
      %p90 = scmp.ne.s32.totalorder %s76, %s77
      %p91 = scmp.eq.s32.totalorder %s16, 7
      %p92 = por %p90, %p91
      %p94 = scmp.ne.s32.totalorder %s77, %s93
      %p95 = scmp.eq.s32.totalorder %s16, 0
      %p96 = por %p94, %p95
      %p97 = scmp.le.s32.totalorder 1, %s10
      %p98 = scmp.lt.s32.totalorder %s10, 9
      %p99 = pnand %p97, %p98
      %p100 = pneg %p99
      // Predicated region
      $region9: #{tpu_custom_call.1} parent=5 // pred_check
        _
      $region10: #{tpu_custom_call.1} parent=5 // pred_check_branch
        %102 = sbr.rel (%p99) target = $region12
      $region11: #{tpu_custom_call.1} parent=5 // pred_region
        %s103 = ssub.s32 %s10, 1
      $region12: #{tpu_custom_call.1} parent=5 // pred_fallthru
        _
      %p104 = scmp.lt.s32.totalorder %s10, 8
      // Predicated region
      $region13: #{tpu_custom_call.1} parent=5 // pred_check
        %p105 = pneg %p104
      $region14: #{tpu_custom_call.1} parent=5 // pred_check_branch
        %107 = sbr.rel (%p105) target = $region16
      $region15: #{tpu_custom_call.1} parent=5 // pred_region
        // Predicated region
        $region17: #{tpu_custom_call.1} parent=15 // pred_check
          %p108 = pneg %p55
        $region18: #{tpu_custom_call.1} parent=15 // pred_check_branch
          %110 = sbr.rel (%p108) target = $region20
        $region19: #{tpu_custom_call.1} parent=15 // pred_region
          %s111 = sand.u32 %s45, 1
          %s112 = scalar_lea.sflag [#allocation3], %s111
          %s113 = sand.u32 %s45, 1
          %s114 = smul.addr %s113, 64
          %s115 = scalar_lea.vmem [#allocation2], %s114
          %s116 = smul.u32 %s18, 2
          %s117 = sadd.s32 %s116, %s19
          %s118 = smul.u32 2, %s117
          %s120 = ssub.s32 1024, 1024
          %121 = vsyncadd %s112, %s120
          %s122 = smul.addr %s17, 32
          %s123 = sadd.s32 %s118, %s122
          %s124 = smul.addr %s123, 128
          %s125 = scalar_lea.hbm %s0, %s124
          %s126 = sshll.u32 %s115, 4
          %s127 = int_to_ptr.vmem [resolvable:$true] %s126
          %132 = dma.hbm_to_vmem [thread:$0]  %s125, 1024, %s127, %s112, 1024, 256, 16
        $region20: #{tpu_custom_call.1} parent=15 // pred_fallthru
          _
      $region16: #{tpu_custom_call.1} parent=5 // pred_fallthru
        _
      %p133 = scmp.le.s32.totalorder 1, %s10
      %p134 = scmp.lt.s32.totalorder %s10, 9
      %p135 = pnand %p133, %p134
      %p136 = pneg %p135
      // Predicated region
      $region21: #{tpu_custom_call.1} parent=5 // pred_check
        _
      $region22: #{tpu_custom_call.1} parent=5 // pred_check_branch
        %138 = sbr.rel (%p135) target = $region24
      $region23: #{tpu_custom_call.1} parent=5 // pred_region
        %s139 = ssub.s32 %s10, 1
        %s140 = sand.u32 %s48, 1
        %s141 = scalar_lea.sflag [#allocation3], %s140
        %s142 = sand.u32 %s48, 1
        %s143 = smul.addr %s142, 64
        %s144 = scalar_lea.vmem [#allocation2], %s143
        // Predicated region
        $region25: #{tpu_custom_call.1} parent=23 // pred_check
          %p145 = pneg %p61
        $region26: #{tpu_custom_call.1} parent=23 // pred_check_branch
          %147 = sbr.rel (%p145) target = $region28
        $region27: #{tpu_custom_call.1} parent=23 // pred_region
          %148 = dma.done %s141, 1024
        $region28: #{tpu_custom_call.1} parent=23 // pred_fallthru
          _
        %s149 = sand.u32 %s48, 1
        %s150 = scalar_lea.sflag [#allocation3], %s149
        %s151 = sand.u32 %s48, 1
        %s152 = smul.addr %s151, 64
        %s153 = scalar_lea.vmem [#allocation2], %s152
        %p154 = pneg %p61
        %p155 = pneg %p58
        %p156 = pneg %p89
        %p157 = pneg %p86
        %p158 = scmp.lt.s32.totalorder %s20, 1
        %s159 = scalar_select %p158, %s20, 1
        %p160 = scmp.lt.s32.totalorder %s21, 1
        %s161 = scalar_select %p160, %s21, 1
        %s162 = smul.addr %s161, 4
        %s163 = smul.addr %s159, 8
        %s164 = sadd.s32 %s162, %s163
        %s165 = smul.addr %s164, 8
        %s166 = scalar_lea.vmem %s1, %s165
        %s167 = smul.u32 %s21, 2
        %s168 = sadd.s32 %s167, %s22
        %s169 = smul.u32 2, %s168
        %p170 = scmp.lt.s32.totalorder %s20, 1
        %s171 = scalar_select %p170, %s20, 1
        %p172 = scmp.lt.s32.totalorder %s21, 1
        %s173 = scalar_select %p172, %s21, 1
        %s174 = smul.addr %s173, 4
        %s175 = smul.addr %s171, 8
        %s176 = sadd.s32 %s174, %s175
        %s177 = smul.addr %s176, 8
        %s178 = scalar_lea.vmem %s1, %s177
        %p179 = scmp.eq.s32.totalorder %s22, 0
        // Predicated region
        $region29: #{tpu_custom_call.1} parent=23 // pred_check
          %p180 = pneg %p179
        $region30: #{tpu_custom_call.1} parent=23 // pred_check_branch
          %182 = sbr.rel (%p180) target = $region32
        $region31: #{tpu_custom_call.1} parent=23 // pred_region
          %vm183 = vcmask 7168
          %184 = vst.msk [vmem:[%s178] sm:$0xff] %vm183, 0.0
          %185 = vst.msk [vmem:[%s178 + $0x8] sm:$0xff] %vm183, 0.0
          %186 = vst.msk [vmem:[%s178 + $0x10] sm:$0xff] %vm183, 0.0
          %187 = vst.msk [vmem:[%s178 + $0x18] sm:$0xff] %vm183, 0.0
        $region32: #{tpu_custom_call.1} parent=23 // pred_fallthru
          _
        %v188 = vld [vmem:[%s144] sm:$0xff]
        %v189 = vld [vmem:[%s144 + $0x8] sm:$0xff]
        %v190 = vld [vmem:[%s144 + $0x10] sm:$0xff]
        %v191 = vld [vmem:[%s144 + $0x18] sm:$0xff]
        %v192 = vld [vmem:[%s144 + $0x20] sm:$0xff]
        %v193 = vld [vmem:[%s144 + $0x28] sm:$0xff]
        %v194 = vld [vmem:[%s144 + $0x30] sm:$0xff]
        %v195 = vld [vmem:[%s144 + $0x38] sm:$0xff]
        %v196 = vld [vmem:[%s178] sm:$0xff]
        %v197 = vld [vmem:[%s178 + $0x8] sm:$0xff]
        %v198 = vld [vmem:[%s178 + $0x10] sm:$0xff]
        %v199 = vld [vmem:[%s178 + $0x18] sm:$0xff]
        %v200 = vadd.f32 %v188, %v189
        %201 = vadd.xlane.f32.xlu0 %v200
        %v202 = vpop.xlane.xlu0 %201
        %v203 = vadd.f32 %v190, %v191
        %204 = vadd.xlane.f32.xlu0 %v203
        %v205 = vpop.xlane.xlu0 %204
        %v206 = vadd.f32 %v192, %v193
        %207 = vadd.xlane.f32.xlu0 %v206
        %v208 = vpop.xlane.xlu0 %207
        %v209 = vadd.f32 %v194, %v195
        %210 = vadd.xlane.f32.xlu0 %v209
        %v211 = vpop.xlane.xlu0 %210
        %v212 = vadd.f32 %v196, %v202
        %v213 = vadd.f32 %v197, %v205
        %v214 = vadd.f32 %v198, %v208
        %v215 = vadd.f32 %v199, %v211
        %vm216 = vcmask 7168
        %217 = vst.msk [vmem:[%s178] sm:$0xff] %vm216, %v212
        %218 = vst.msk [vmem:[%s178 + $0x8] sm:$0xff] %vm216, %v213
        %219 = vst.msk [vmem:[%s178 + $0x10] sm:$0xff] %vm216, %v214
        %220 = vst.msk [vmem:[%s178 + $0x18] sm:$0xff] %vm216, %v215
        %p221 = scmp.lt.s32.totalorder %s20, 1
        %s222 = scalar_select %p221, %s20, 1
        %p223 = scmp.lt.s32.totalorder %s21, 1
        %s224 = scalar_select %p223, %s21, 1
        %s225 = smul.addr %s224, 4
        %s226 = smul.addr %s222, 8
        %s227 = sadd.s32 %s225, %s226
        %s228 = smul.addr %s227, 8
        %s229 = scalar_lea.vmem %s1, %s228
        // Predicated region
        $region33: #{tpu_custom_call.1} parent=23 // pred_check
          %p230 = pneg %p86
        $region34: #{tpu_custom_call.1} parent=23 // pred_check_branch
          %232 = sbr.rel (%p230) target = $region36
        $region35: #{tpu_custom_call.1} parent=23 // pred_region
          _
        $region36: #{tpu_custom_call.1} parent=23 // pred_fallthru
          _
      $region24: #{tpu_custom_call.1} parent=5 // pred_fallthru
        _
      %p233 = scmp.le.s32.totalorder 2, %s10
      // Predicated region
      $region37: #{tpu_custom_call.1} parent=5 // pred_check
        %p234 = pneg %p233
      $region38: #{tpu_custom_call.1} parent=5 // pred_check_branch
        %236 = sbr.rel (%p234) target = $region40
      $region39: #{tpu_custom_call.1} parent=5 // pred_region
        %s237 = ssub.s32 %s10, 2
        // Predicated region
        $region41: #{tpu_custom_call.1} parent=39 // pred_check
          %p238 = pneg %p92
        $region42: #{tpu_custom_call.1} parent=39 // pred_check_branch
          %240 = sbr.rel (%p238) target = $region44
        $region43: #{tpu_custom_call.1} parent=39 // pred_region
          %p241 = scmp.lt.s32.totalorder %s23, 1
          %s242 = scalar_select %p241, %s23, 1
          %p243 = scmp.lt.s32.totalorder %s24, 1
          %s244 = scalar_select %p243, %s24, 1
          %s245 = smul.addr %s244, 4
          %s246 = smul.addr %s242, 8
          %s247 = sadd.s32 %s245, %s246
          %s248 = smul.addr %s247, 8
          %s249 = scalar_lea.vmem %s1, %s248
        $region44: #{tpu_custom_call.1} parent=39 // pred_fallthru
          _
      $region40: #{tpu_custom_call.1} parent=5 // pred_fallthru
        _
    $region6: #{tpu_custom_call.1} parent=1 // loop_footer
      %s14 = sadd.s32 1, %s10
    $region7: #{tpu_custom_call.1} parent=1 // loop_footer_branch
      %9 = sbr.rel target = $region3
    $region8: #{tpu_custom_call.1} parent=1 // loop_exit
      _
    %250 = vsyncpa [#allocation3], 1
    %s251 = scalar_lea.sflag [#allocation3], 1
    %252 = vsyncpa %s251, 1

</llo_original>
